<compile_context>
chip_gen: v5e
topology: v5e:2x2
jax: 0.10.0
libtpu: 0.0.40
codegen_flags: <defaults>
</compile_context>

<pallas_src>
import jax
import jax.numpy as jnp
from jax.experimental import pallas as pl
from jax.experimental.pallas import tpu as pltpu

_LANE = 128
_SUBLANE = 8
_EPS = 1e-12  # F.normalize clamp_min


def _round_up(x, m):
    return (x + m - 1) // m * m


# ---------------------------------------------------------------------------
# Fused tower kernel: for one row tile, compute every layer and write the
# concatenated per-layer embeddings into a single lane-dense output block.
# ---------------------------------------------------------------------------
def _make_tower_kernel(layer_dims, d_in):
    num_layers = len(layer_dims)

    def kernel(h_ref, *refs):
        o_ref = refs[-1]                       # (tile, d_total_pad) f32
        # Zero the whole lane-dense block (also clears the 128-pad lanes).
        o_ref[...] = jnp.zeros_like(o_ref)

        h = h_ref[...]                         # (tile, d_in) f32
        o_ref[:, 0:d_in] = h                   # layer-0 embedding slice
        off = d_in
        for l in range(num_layers):
            w = refs[2 * l][...]               # (d_prev, d_l) f32
            b = refs[2 * l + 1][...]           # (1, d_l)      f32
            # bf16 operands on the MXU, f32 accumulation.
            y = jnp.dot(h.astype(jnp.bfloat16), w.astype(jnp.bfloat16),
                        preferred_element_type=jnp.float32)
            y = y + b                          # bias (f32)
            y = jnp.where(y >= 0.0, y, 0.2 * y)   # LeakyReLU(0.2)
            # Dropout: eval mode -> identity (see TODO above).
            ss = jnp.sum(y * y, axis=1, keepdims=True)
            y = y * jax.lax.rsqrt(jnp.maximum(ss, _EPS * _EPS))  # F.normalize
            d_l = layer_dims[l]
            o_ref[:, off:off + d_l] = y
            h = y
            off += d_l

    return kernel


def ncf_tower(h, layers, *, tile_n=1024):
    """Fused MLP tower + concat of per-layer embeddings.

    h: [N, d_in] float32.  layers: list of (w [d_prev, d_l], b [d_l]).
    Returns [N, d_in + sum(d_l)] float32 (== torch.cat(embeds, 1)).
    """
    n, d_in = h.shape
    layer_dims = [w.shape[1] for (w, _) in layers]
    d_total = d_in + sum(layer_dims)
    d_total_pad = _round_up(d_total, _LANE)    # lane-dense output block

    # Large row tiles, rounded to the sublane granule; pad the ragged tail.
    tile = min(tile_n, _round_up(n, _SUBLANE))
    tile = _round_up(tile, _SUBLANE)
    n_pad = _round_up(n, tile)
    if n_pad != n:
        h = jnp.pad(h, ((0, n_pad - n), (0, 0)))

    kernel = _make_tower_kernel(layer_dims, d_in)

    in_specs = [pl.BlockSpec((tile, d_in), lambda i: (i, 0))]
    args = [h]
    for (w, b) in layers:
        dp, dl = w.shape
        in_specs.append(pl.BlockSpec((dp, dl), lambda i: (0, 0)))
        in_specs.append(pl.BlockSpec((1, dl), lambda i: (0, 0)))
        args.append(w)
        args.append(b.reshape(1, dl))

    out = pl.pallas_call(
        kernel,
        out_shape=jax.ShapeDtypeStruct((n_pad, d_total_pad), jnp.float32),
        grid_spec=pltpu.PrefetchScalarGridSpec(
            num_scalar_prefetch=0,
            grid=(n_pad // tile,),
            in_specs=in_specs,
            out_specs=pl.BlockSpec((tile, d_total_pad), lambda i: (i, 0)),
        ),
        compiler_params=pltpu.CompilerParams(
            dimension_semantics=("parallel",)),
    )(*args)
    return out[:n, :d_total]


# ---------------------------------------------------------------------------
# NCF module (forward only), parameters built deterministically in-script
# ---------------------------------------------------------------------------
class NCF:
    def __init__(self, in_size, layer_size, num_users, num_items, key):
        self.in_size = in_size
        self.layer_size = list(layer_size)

        dims = [in_size] + self.layer_size
        keys = jax.random.split(key, 2 * len(self.layer_size) + 2)
        ki = iter(keys)

        def linear_params(k, d_in, d_out):
            kw, kb = jax.random.split(k)
            bound = 1.0 / jnp.sqrt(d_in)
            # stored already transposed: [d_in, d_out]
            w = jax.random.uniform(kw, (d_in, d_out), jnp.float32, -bound, bound)
            b = jax.random.uniform(kb, (d_out,), jnp.float32, -bound, bound)
            return w, b

        self.user_layers = [linear_params(next(ki), dims[i], dims[i + 1])
                            for i in range(len(self.layer_size))]
        self.item_layers = [linear_params(next(ki), dims[i], dims[i + 1])
                            for i in range(len(self.layer_size))]

        def xavier(k, n, d):
            a = jnp.sqrt(6.0 / (n + d))
            return jax.random.uniform(k, (n, d), jnp.float32, -a, a)

        self.h_user = xavier(next(ki), num_users, in_size)
        self.h_item = xavier(next(ki), num_items, in_size)

    def forward(self, users, pos_items, neg_items):
        # Gather-first: the towers are row-wise, so only the batch rows are
        # ever needed -> gather then compute (semantically identical output).
        u_feat = jnp.take(self.h_user, users, axis=0)
        pos_feat = jnp.take(self.h_item, pos_items, axis=0)
        neg_feat = jnp.take(self.h_item, neg_items, axis=0)

        u_g = ncf_tower(u_feat, self.user_layers)

        # Run the item tower once over [pos; neg] rows.
        item_feat = jnp.concatenate([pos_feat, neg_feat], axis=0)
        item_emb = ncf_tower(item_feat, self.item_layers)
        nb = pos_feat.shape[0]
        return u_g, item_emb[:nb], item_emb[nb:]


# ---------------------------------------------------------------------------
# Pure-JAX reference (original spec semantics: full tables, then gather)
# ---------------------------------------------------------------------------
def _ref_tower(h, layers):
    embeds = [h]
    for (w, b) in layers:
        y = h @ w + b
        y = jnp.where(y >= 0.0, y, 0.2 * y)
        nrm = jnp.sqrt(jnp.sum(y * y, axis=1, keepdims=True))
        y = y / jnp.maximum(nrm, _EPS)
        embeds.append(y)
        h = y
    return jnp.concatenate(embeds, axis=1)


def _ref_forward(model, users, pos_items, neg_items):
    user_embd = _ref_tower(model.h_user, model.user_layers)
    item_embd = _ref_tower(model.h_item, model.item_layers)
    return (jnp.take(user_embd, users, axis=0),
            jnp.take(item_embd, pos_items, axis=0),
            jnp.take(item_embd, neg_items, axis=0))


if __name__ == "__main__":
    key = jax.random.PRNGKey(0)
    in_size = 32
    layer_size = [32, 16]
    num_users = 260          # ragged vs tile -> exercises padded last tile
    num_items = 160
    batch = 8

    k_model, k1, k2, k3 = jax.random.split(key, 4)
    model = NCF(in_size, layer_size, num_users, num_items, k_model)

    users = jax.random.randint(k1, (batch,), 0, num_users)
    pos_items = jax.random.randint(k2, (batch,), 0, num_items)
    neg_items = jax.random.randint(k3, (batch,), 0, num_items)

    u_g, pos_i, neg_i = model.forward(users, pos_items, neg_items)
    jax.block_until_ready((u_g, pos_i, neg_i))

    # Sanity 1: fused tower on the full user table (multi-tile grid + ragged
    # tail) matches the pure-JAX f32 reference (bf16 MXU -> loosened tol).
    got = ncf_tower(model.h_user, model.user_layers, tile_n=128)
    want = _ref_tower(model.h_user, model.user_layers)
    assert got.shape == want.shape
    assert jnp.allclose(got, want, atol=2e-2, rtol=2e-2)

    # Sanity 2: gather-first forward matches the original (full-table-then-
    # gather) reference semantics.
    ru, rp, rn = _ref_forward(model, users, pos_items, neg_items)
    assert jnp.allclose(u_g, ru, atol=2e-2, rtol=2e-2)
    assert jnp.allclose(pos_i, rp, atol=2e-2, rtol=2e-2)
    assert jnp.allclose(neg_i, rn, atol=2e-2, rtol=2e-2)

    expected_dim = in_size + sum(layer_size)
    assert u_g.shape == (batch, expected_dim)
    assert pos_i.shape == (batch, expected_dim)
    assert neg_i.shape == (batch, expected_dim)

    print("KERNEL_OK")
</pallas_src>

<mosaic_0001>
module attributes {stable_mosaic.version = 11 : i64} {
  func.func @kernel(%arg0: i32, %arg1: memref<8x32xf32, #tpu.memory_space<vmem>>, %arg2: memref<32x32xf32, #tpu.memory_space<vmem>>, %arg3: memref<1x32xf32, #tpu.memory_space<vmem>>, %arg4: memref<32x16xf32, #tpu.memory_space<vmem>>, %arg5: memref<1x16xf32, #tpu.memory_space<vmem>>, %arg6: memref<8x128xf32, #tpu.memory_space<vmem>>) attributes {dimension_semantics = [#tpu.dimension_semantics<parallel>], iteration_bounds = array<i64: 1>, scalar_prefetch = 0 : i64, scratch_operands = 0 : i64, tpu.core_type = #tpu.core_type<tc>, window_params = [{transform_indices = @transform_0, window_bounds = array<i64: 8, 32>}, {pipeline_mode = #tpu.pipeline_mode<synchronous>, transform_indices = @transform_1, window_bounds = array<i64: 32, 32>}, {pipeline_mode = #tpu.pipeline_mode<synchronous>, transform_indices = @transform_2, window_bounds = array<i64: 1, 32>}, {pipeline_mode = #tpu.pipeline_mode<synchronous>, transform_indices = @transform_3, window_bounds = array<i64: 32, 16>}, {pipeline_mode = #tpu.pipeline_mode<synchronous>, transform_indices = @transform_4, window_bounds = array<i64: 1, 16>}, {transform_indices = @transform_5, window_bounds = array<i64: 8, 128>}]} {
    %cst = arith.constant 0.000000e+00 : f32
    %0 = vector.broadcast %cst : f32 to vector<8x128xf32>
    %c0 = arith.constant 0 : index
    %c0_0 = arith.constant 0 : index
    %1 = vector.load %arg6[%c0, %c0_0] : memref<8x128xf32, #tpu.memory_space<vmem>>, vector<8x128xf32>
    tpu.vector_store %arg6[%c0, %c0_0], %0 {strides = array<i32>} : memref<8x128xf32, #tpu.memory_space<vmem>>, vector<8x128xf32>,
    %c0_1 = arith.constant 0 : index
    %c0_2 = arith.constant 0 : index
    %2 = vector.load %arg1[%c0_1, %c0_2] : memref<8x32xf32, #tpu.memory_space<vmem>>, vector<8x32xf32>
    %c0_3 = arith.constant 0 : index
    %c0_4 = arith.constant 0 : index
    %3 = vector.load %arg6[%c0_3, %c0_4] : memref<8x128xf32, #tpu.memory_space<vmem>>, vector<8x32xf32>
    tpu.vector_store %arg6[%c0_3, %c0_4], %2 {strides = array<i32>} : memref<8x128xf32, #tpu.memory_space<vmem>>, vector<8x32xf32>,
    %c0_5 = arith.constant 0 : index
    %c0_6 = arith.constant 0 : index
    %4 = vector.load %arg2[%c0_5, %c0_6] : memref<32x32xf32, #tpu.memory_space<vmem>>, vector<32x32xf32>
    %c0_7 = arith.constant 0 : index
    %c0_8 = arith.constant 0 : index
    %5 = vector.load %arg3[%c0_7, %c0_8] : memref<1x32xf32, #tpu.memory_space<vmem>>, vector<1x32xf32>
    %6 = arith.truncf %2 : vector<8x32xf32> to vector<8x32xbf16>
    %7 = arith.truncf %4 : vector<32x32xf32> to vector<32x32xbf16>
    %cst_9 = arith.constant dense<0.000000e+00> : vector<8x32xf32>
    %8 = tpu.matmul %6, %7, %cst_9 {dimension_numbers = #tpu.dot_dimension_numbers<[1], [0], [0], [1], [0, 0, 1, 1], [], []>} : vector<8x32xbf16>, vector<32x32xbf16>, vector<8x32xf32> -> vector<8x32xf32>
    %9 = vector.broadcast %5 : vector<1x32xf32> to vector<8x32xf32>
    %10 = arith.addf %8, %9 : vector<8x32xf32>
    %cst_10 = arith.constant 0.000000e+00 : f32
    %11 = vector.broadcast %cst_10 : f32 to vector<8x32xf32>
    %12 = arith.cmpf oge, %10, %11 : vector<8x32xf32>
    %cst_11 = arith.constant 2.000000e-01 : f32
    %13 = vector.broadcast %cst_11 : f32 to vector<8x32xf32>
    %14 = arith.mulf %13, %10 : vector<8x32xf32>
    %15 = arith.select %12, %10, %14 : vector<8x32xi1>, vector<8x32xf32>
    %16 = arith.mulf %15, %15 : vector<8x32xf32>
    %cst_12 = arith.constant dense<0.000000e+00> : vector<8xf32>
    %17 = vector.multi_reduction <add>, %16, %cst_12 [1] : vector<8x32xf32> to vector<8xf32>
    %18 = vector.shape_cast %17 : vector<8xf32> to vector<8x1xf32>
    %cst_13 = arith.constant 1.000000e-24 : f32
    %19 = vector.broadcast %cst_13 : f32 to vector<8x1xf32>
    %20 = arith.maximumf %18, %19 : vector<8x1xf32>
    %21 = math.rsqrt %20 : vector<8x1xf32>
    %22 = vector.broadcast %21 : vector<8x1xf32> to vector<8x32xf32>
    %23 = arith.mulf %15, %22 : vector<8x32xf32>
    %c0_14 = arith.constant 0 : index
    %c32 = arith.constant 32 : index
    %24 = vector.load %arg6[%c0_14, %c32] : memref<8x128xf32, #tpu.memory_space<vmem>>, vector<8x32xf32>
    tpu.vector_store %arg6[%c0_14, %c32], %23 {strides = array<i32>} : memref<8x128xf32, #tpu.memory_space<vmem>>, vector<8x32xf32>,
    %c0_15 = arith.constant 0 : index
    %c0_16 = arith.constant 0 : index
    %25 = vector.load %arg4[%c0_15, %c0_16] : memref<32x16xf32, #tpu.memory_space<vmem>>, vector<32x16xf32>
    %c0_17 = arith.constant 0 : index
    %c0_18 = arith.constant 0 : index
    %26 = vector.load %arg5[%c0_17, %c0_18] : memref<1x16xf32, #tpu.memory_space<vmem>>, vector<1x16xf32>
    %27 = arith.truncf %23 : vector<8x32xf32> to vector<8x32xbf16>
    %28 = arith.truncf %25 : vector<32x16xf32> to vector<32x16xbf16>
    %cst_19 = arith.constant dense<0.000000e+00> : vector<8x16xf32>
    %29 = tpu.matmul %27, %28, %cst_19 {dimension_numbers = #tpu.dot_dimension_numbers<[1], [0], [0], [1], [0, 0, 1, 1], [], []>} : vector<8x32xbf16>, vector<32x16xbf16>, vector<8x16xf32> -> vector<8x16xf32>
    %30 = vector.broadcast %26 : vector<1x16xf32> to vector<8x16xf32>
    %31 = arith.addf %29, %30 : vector<8x16xf32>
    %cst_20 = arith.constant 0.000000e+00 : f32
    %32 = vector.broadcast %cst_20 : f32 to vector<8x16xf32>
    %33 = arith.cmpf oge, %31, %32 : vector<8x16xf32>
    %cst_21 = arith.constant 2.000000e-01 : f32
    %34 = vector.broadcast %cst_21 : f32 to vector<8x16xf32>
    %35 = arith.mulf %34, %31 : vector<8x16xf32>
    %36 = arith.select %33, %31, %35 : vector<8x16xi1>, vector<8x16xf32>
    %37 = arith.mulf %36, %36 : vector<8x16xf32>
    %cst_22 = arith.constant dense<0.000000e+00> : vector<8xf32>
    %38 = vector.multi_reduction <add>, %37, %cst_22 [1] : vector<8x16xf32> to vector<8xf32>
    %39 = vector.shape_cast %38 : vector<8xf32> to vector<8x1xf32>
    %cst_23 = arith.constant 1.000000e-24 : f32
    %40 = vector.broadcast %cst_23 : f32 to vector<8x1xf32>
    %41 = arith.maximumf %39, %40 : vector<8x1xf32>
    %42 = math.rsqrt %41 : vector<8x1xf32>
    %43 = vector.broadcast %42 : vector<8x1xf32> to vector<8x16xf32>
    %44 = arith.mulf %36, %43 : vector<8x16xf32>
    %c0_24 = arith.constant 0 : index
    %c64 = arith.constant 64 : index
    %45 = vector.load %arg6[%c0_24, %c64] : memref<8x128xf32, #tpu.memory_space<vmem>>, vector<8x16xf32>
    tpu.vector_store %arg6[%c0_24, %c64], %44 {strides = array<i32>} : memref<8x128xf32, #tpu.memory_space<vmem>>, vector<8x16xf32>,
    return
  }
  func.func @transform_0(%arg0: i32) -> (i32, i32) {
    %c0_i32 = arith.constant 0 : i32
    %c0_i32_0 = arith.constant 0 : i32
    return %arg0, %c0_i32 : i32, i32
  }
  func.func @transform_1(%arg0: i32) -> (i32, i32) {
    %c0_i32 = arith.constant 0 : i32
    %c0_i32_0 = arith.constant 0 : i32
    %c0_i32_1 = arith.constant 0 : i32
    return %c0_i32, %c0_i32_0 : i32, i32
  }
  func.func @transform_2(%arg0: i32) -> (i32, i32) {
    %c0_i32 = arith.constant 0 : i32
    %c0_i32_0 = arith.constant 0 : i32
    %c0_i32_1 = arith.constant 0 : i32
    return %c0_i32, %c0_i32_0 : i32, i32
  }
  func.func @transform_3(%arg0: i32) -> (i32, i32) {
    %c0_i32 = arith.constant 0 : i32
    %c0_i32_0 = arith.constant 0 : i32
    %c0_i32_1 = arith.constant 0 : i32
    return %c0_i32, %c0_i32_0 : i32, i32
  }
  func.func @transform_4(%arg0: i32) -> (i32, i32) {
    %c0_i32 = arith.constant 0 : i32
    %c0_i32_0 = arith.constant 0 : i32
    %c0_i32_1 = arith.constant 0 : i32
    return %c0_i32, %c0_i32_0 : i32, i32
  }
  func.func @transform_5(%arg0: i32) -> (i32, i32) {
    %c0_i32 = arith.constant 0 : i32
    %c0_i32_0 = arith.constant 0 : i32
    return %arg0, %c0_i32 : i32, i32
  }
}

</mosaic_0001>

<llo_original>
// kernel: tpu_custom_call.1
$region0: #{tpu_custom_call.1}
  #allocation0 [shape = 'u32[]', space=smem, size = 0x4, offset = 0x4, fixed_abs, tag = 'smem constant byte address 0x4 - core index']
  #allocation1 [shape = 'u32[72,128]{1,0:T(1,128)}', space=vmem, size = 0x9000, scoped, tag = 'internal scratch']
  %s0 = inlined_call_operand.vmem [shape: f32[8,32], index: 0, kind: input, shape index: {}]
  %s1 = inlined_call_operand.vmem [shape: f32[32,32], index: 1, kind: input, shape index: {}]
  %s2 = inlined_call_operand.vmem [shape: f32[1,32], index: 2, kind: input, shape index: {}]
  %s3 = inlined_call_operand.vmem [shape: f32[32,16], index: 3, kind: input, shape index: {}]
  %s4 = inlined_call_operand.vmem [shape: f32[1,16], index: 4, kind: input, shape index: {}]
  %s5 = inlined_call_operand.hbm [shape: f32[8,128], index: 5, kind: output, shape index: {}]
  %s6 = sld [smem:[#allocation0]]
  $region30: #{tpu_custom_call.1} parent=0
    _
  %s8 = ssub.s32 1, %s6
  %s9 = scalar_select 0, %s8, %s6
  $region1: #{tpu_custom_call.1} parent=0
    #allocation2 [shape = 'u8[4096]{0}', space=vmem, size = 0x1000, scoped, tag = 'output window, operand 0, single buffered']
    #allocation3 [shape = 's32[1]{0}', space=sflag, size = 0x4, scoped, tag = 'scoped memory for tpu_custom_call.1']
    %10 = vsyncpa [#allocation3], 0
    // Predicated region
    $region2: #{tpu_custom_call.1} parent=1 // pred_check
      _
    $region3: #{tpu_custom_call.1} parent=1 // pred_check_branch
      %12 = sbr.rel (0) target = $region5
    $region4: #{tpu_custom_call.1} parent=1 // pred_region
      _
    $region5: #{tpu_custom_call.1} parent=1 // pred_fallthru
      _
    // Predicated region
    $region6: #{tpu_custom_call.1} parent=1 // pred_check
      _
    $region7: #{tpu_custom_call.1} parent=1 // pred_check_branch
      %14 = sbr.rel (0) target = $region9
    $region8: #{tpu_custom_call.1} parent=1 // pred_region
      _
    $region9: #{tpu_custom_call.1} parent=1 // pred_fallthru
      _
    // Predicated region
    $region10: #{tpu_custom_call.1} parent=1 // pred_check
      _
    $region11: #{tpu_custom_call.1} parent=1 // pred_check_branch
      %16 = sbr.rel (0) target = $region13
    $region12: #{tpu_custom_call.1} parent=1 // pred_region
      _
    $region13: #{tpu_custom_call.1} parent=1 // pred_fallthru
      _
    // Predicated region
    $region14: #{tpu_custom_call.1} parent=1 // pred_check
      _
    $region15: #{tpu_custom_call.1} parent=1 // pred_check_branch
      %18 = sbr.rel (0) target = $region17
    $region16: #{tpu_custom_call.1} parent=1 // pred_region
      _
    $region17: #{tpu_custom_call.1} parent=1 // pred_fallthru
      _
    // Predicated region
    $region18: #{tpu_custom_call.1} parent=1 // pred_check
      _
    $region19: #{tpu_custom_call.1} parent=1 // pred_check_branch
      %20 = sbr.rel (0) target = $region21
    $region20: #{tpu_custom_call.1} parent=1 // pred_region
      _
    $region21: #{tpu_custom_call.1} parent=1 // pred_fallthru
      _
    %22 = vst [vmem:[#allocation2] sm:$0xff] 0.0
    %v23 = vld [vmem:[%s0] sm:$0xff]
    %vm24 = vcmask 261120
    %25 = vst.msk [vmem:[#allocation2] sm:$0xff] %vm24, %v23
    %v26 = vld [vmem:[%s1] sm:$0xff]
    %v27 = vld [vmem:[%s1 + $0x8] sm:$0xff]
    %v28 = vld [vmem:[%s1 + $0x10] sm:$0xff]
    %v29 = vld [vmem:[%s1 + $0x18] sm:$0xff]
    %v30 = vld [vmem:[%s2] sm:$0x1]
    %v31 = vpack.c.bf16 %v23, %v23
    %v32 = vpack.c.bf16 %v27, %v26
    %v33 = vpack.c.bf16 %v29, %v28
    %v35 = vperm.slane %v30, 0
    %v38 = vsel %vm24, %v31, 0
    %40 = vmatpush.bf16.msra.mxu0 0
    %41 = vmatpush.bf16.msra.mxu0 0
    %42 = vmatpush.bf16.msra.mxu0 0
    %43 = vmatpush.bf16.msra.mxu0 0
    %44 = vmatpush.bf16.msra.mxu0 0
    %45 = vmatpush.bf16.msra.mxu0 0
    %46 = vmatpush.bf16.msra.mxu0 %v33
    %47 = vmatpush.bf16.msra.mxu0 %v32
    %48 = vmatmul.bf16.gmra.mxu0 %v38
    %v49 = vpop.f32.mrf.mxu0
    %v50 = vadd.f32 %v35, %v49
    %v51 = vpop.f32.mrf.mxu0
    %52 = vdwg.mxu0
    %vm53 = vcmp.ge.f32.partialorder %v50, 0.0
    %v54 = vmul.f32 %v50, 0.2
    %v55 = vsel %vm53, %v50, %v54
    %v56 = vmul.f32 %v55, %v55
    %v57 = vsel %vm24, %v56, 0.0
    %58 = vadd.xlane.f32.xlu0 %v57
    %v59 = vpop.xlane.xlu0 %58
    %v60 = vmax.f32 %v59, 1e-24
    %v61 = vrsqrt.pop %v60
    %v62 = vmul.f32 %v61, %v60
    %v63 = vmul.f32 %v62, %v61
    %v64 = vmul.f32 0.5, %v63
    %v65 = vsub.f32 1.5, %v64
    %v66 = vmul.f32 %v61, %v65
    %vm67 = vweird.f32 %v60
    %vm68 = vweird.f32 %v61
    %vm69 = vmor %vm67, %vm68
    %v70 = vsel %vm69, %v61, %v66
    %v71 = vmul.f32 %v55, %v70
    %73 = vrot.lane.b32.xlu0 %v71, 32
    %v74 = vpop.permute.xlu0 %73
    %vm76 = vcmask 523520
    %77 = vst.msk [vmem:[#allocation2] sm:$0xff] %vm76, %v74
    %v78 = vld [vmem:[%s3] sm:$0xff]
    %v79 = vld [vmem:[%s3 + $0x8] sm:$0xff]
    %v80 = vld [vmem:[%s3 + $0x10] sm:$0xff]
    %v81 = vld [vmem:[%s3 + $0x18] sm:$0xff]
    %v82 = vld [vmem:[%s4] sm:$0x1]
    %v83 = vpack.c.bf16 %v71, %v71
    %v84 = vpack.c.bf16 %v79, %v78
    %v85 = vpack.c.bf16 %v81, %v80
    %v87 = vperm.slane %v82, 0
    %v90 = vsel %vm24, %v83, 0
    %92 = vmatpush.bf16.msra.mxu0 0
    %93 = vmatpush.bf16.msra.mxu0 0
    %94 = vmatpush.bf16.msra.mxu0 0
    %95 = vmatpush.bf16.msra.mxu0 0
    %96 = vmatpush.bf16.msra.mxu0 0
    %97 = vmatpush.bf16.msra.mxu0 0
    %98 = vmatpush.bf16.msra.mxu0 %v85
    %99 = vmatpush.bf16.msra.mxu0 %v84
    %100 = vmatmul.bf16.gmra.mxu0 %v90
    %v101 = vpop.f32.mrf.mxu0
    %v102 = vadd.f32 %v87, %v101
    %v103 = vpop.f32.mrf.mxu0
    %104 = vdwg.mxu0
    %vm105 = vcmp.ge.f32.partialorder %v102, 0.0
    %v106 = vmul.f32 %v102, 0.2
    %v107 = vsel %vm105, %v102, %v106
    %v108 = vmul.f32 %v107, %v107
    %vm109 = vcmask 130048
    %v110 = vsel %vm109, %v108, 0.0
    %111 = vadd.xlane.f32.xlu0 %v110
    %v112 = vpop.xlane.xlu0 %111
    %v113 = vmax.f32 %v112, 1e-24
    %v114 = vrsqrt.pop %v113
    %v115 = vmul.f32 %v114, %v113
    %v116 = vmul.f32 %v115, %v114
    %v117 = vmul.f32 0.5, %v116
    %v118 = vsub.f32 1.5, %v117
    %v119 = vmul.f32 %v114, %v118
    %vm120 = vweird.f32 %v113
    %vm121 = vweird.f32 %v114
    %vm122 = vmor %vm120, %vm121
    %v123 = vsel %vm122, %v114, %v119
    %v124 = vmul.f32 %v107, %v123
    %126 = vrot.lane.b32.xlu0 %v124, 64
    %v127 = vpop.permute.xlu0 %126
    %vm129 = vcmask 654848
    %130 = vst.msk [vmem:[#allocation2] sm:$0xff] %vm129, %v127
    // Predicated region
    $region22: #{tpu_custom_call.1} parent=1 // pred_check
      _
    $region23: #{tpu_custom_call.1} parent=1 // pred_check_branch
      %132 = sbr.rel (0) target = $region25
    $region24: #{tpu_custom_call.1} parent=1 // pred_region
      %134 = vsyncadd [#allocation3], 0
      %s136 = sshll.u32 [#allocation2], 4
      %s137 = int_to_ptr.vmem [resolvable:$true] %s136
      %s138 = sshll.u32 %s5, 4
      %s139 = int_to_ptr.hbm [resolvable:$true] %s138
      %141 = dma.vmem_to_hbm [thread:$0]  %s137, 128, %s139, [#allocation3]
    $region25: #{tpu_custom_call.1} parent=1 // pred_fallthru
      _
    // Predicated region
    $region26: #{tpu_custom_call.1} parent=1 // pred_check
      _
    $region27: #{tpu_custom_call.1} parent=1 // pred_check_branch
      %143 = sbr.rel (0) target = $region29
    $region28: #{tpu_custom_call.1} parent=1 // pred_region
      %145 = dma.done [#allocation3], 128
    $region29: #{tpu_custom_call.1} parent=1 // pred_fallthru
      _
    %146 = vsyncpa [#allocation3], 1

</llo_original>
